<compile_context>
chip_gen: v7x
topology: tpu7x:2x2x1
jax: 0.10.0
libtpu: 0.0.40
codegen_flags: <defaults>
</compile_context>

<pallas_src>
import functools
from typing import NamedTuple

import jax
import jax.numpy as jnp
from jax.experimental import pallas as pl
from jax.experimental.pallas import tpu as pltpu

HID = 256          # hidden width of the SAC critic
OUT_LANES = 128    # final weight padded to a lane-aligned 128-wide slab
OUT_Q = 8          # stored output width (only column 0 is real)


def _round_up(x, m):
    return ((x + m - 1) // m) * m


def _choose_tile_b(B):
    # Small batches: round to the sublane quantum.  Larger batches: make sure
    # the batch grid has >= 2 steps (v7x dual-TensorCore sharding) while
    # capping the tile at 1024 rows (conservative for v7x's 64 MiB VMEM; v5e /
    # v6e users can pass tile_b=2048 explicitly to soft_q_forward to sweep).
    if B <= 256:
        return _round_up(max(B, 8), 8)
    half = _round_up(pl.cdiv(B, 2), 256)
    return min(half, 1024)


class SoftQConfig(NamedTuple):
    obs_dim: int
    act_dim: int
    n_hidden: int
    fused: bool
    in_pad: int    # fused path: padded concat width (128)
    obs_pad: int   # split path: padded obs width
    act_pad: int   # split path: padded act width


# ---------------------------------------------------------------------------
# Kernel: one batch tile through the whole MLP.
# Fused path refs:
#   xa_ref (TILE_B, 128) bf16, w0_ref (128, 256) bf16, b0_ref (1, 256) f32
# Split path refs:
#   x_ref (TILE_B, obs_pad) bf16, a_ref (TILE_B, act_pad) bf16,
#   w0x_ref (obs_pad, 256) bf16, w0a_ref (act_pad, 256) bf16, b0_ref (1,256) f32
# Common trailing refs:
#   [wh_ref (n_hidden, 256, 256) bf16, bh_ref (n_hidden, 1, 256) f32]
#   wl_ref (256, 128) bf16 (only col 0 real), bl_ref (1, 128) f32
#   o_ref  (TILE_B, 8) f32   (only col 0 real -> 16x less writeback)
# ---------------------------------------------------------------------------
def _soft_q_kernel(*refs, n_hidden, fused):
    if fused:
        xa_ref, w0_ref, b0_ref, *rest = refs
        h = jnp.dot(xa_ref[...], w0_ref[...], preferred_element_type=jnp.float32)
    else:
        x_ref, a_ref, w0x_ref, w0a_ref, b0_ref, *rest = refs
        h = jnp.dot(x_ref[...], w0x_ref[...], preferred_element_type=jnp.float32)
        h = h + jnp.dot(a_ref[...], w0a_ref[...], preferred_element_type=jnp.float32)
    h = jnp.maximum(h + b0_ref[...], 0.0)

    if n_hidden > 0:
        wh_ref, bh_ref, wl_ref, bl_ref, o_ref = rest
        for i in range(n_hidden):  # statically unrolled
            h = jnp.dot(h.astype(jnp.bfloat16), wh_ref[i],
                        preferred_element_type=jnp.float32)
            h = jnp.maximum(h + bh_ref[i], 0.0)
    else:
        wl_ref, bl_ref, o_ref = rest

    # Final linear (no activation).  Matmul stays lane-aligned (N=128);
    # only the first OUT_Q columns are stored (col 0 is the real q-value).
    q = jnp.dot(h.astype(jnp.bfloat16), wl_ref[...],
                preferred_element_type=jnp.float32) + bl_ref[...]
    o_ref[...] = q[:, :OUT_Q]


# ---------------------------------------------------------------------------
# One-time packing of PyTorch-convention params (W:(out,in), b:(out,)).
# Weights -> bf16, biases -> f32.  Returns (weights_dict, static_config).
# ---------------------------------------------------------------------------
def pack_soft_q_params(params, obs_dim, act_dim):
    assert len(params) >= 2, "SoftQNetwork kernel assumes n_layers >= 1"
    in_dim = obs_dim + act_dim
    fused = in_dim <= 128

    W0, b0 = params[0]
    W0 = W0.astype(jnp.float32)
    weights = {}

    if fused:
        in_pad, obs_pad, act_pad = 128, 0, 0
        weights["w0"] = jnp.pad(W0.T, ((0, in_pad - in_dim), (0, 0))).astype(jnp.bfloat16)
    else:
        in_pad = 0
        obs_pad = _round_up(obs_dim, 128)
        act_pad = _round_up(act_dim, 128)
        # torch.cat([x, a], 1): columns [0, obs_dim) are obs, rest are act.
        weights["w0x"] = jnp.pad(W0[:, :obs_dim].T,
                                 ((0, obs_pad - obs_dim), (0, 0))).astype(jnp.bfloat16)
        weights["w0a"] = jnp.pad(W0[:, obs_dim:].T,
                                 ((0, act_pad - act_dim), (0, 0))).astype(jnp.bfloat16)
    weights["b0"] = b0.reshape(1, HID).astype(jnp.float32)

    hidden = params[1:-1]
    n_hidden = len(hidden)
    if n_hidden > 0:
        weights["wh"] = jnp.stack(
            [W.astype(jnp.float32).T for W, _ in hidden]).astype(jnp.bfloat16)
        weights["bh"] = jnp.stack(
            [b.reshape(1, HID).astype(jnp.float32) for _, b in hidden])

    WL, bL = params[-1]
    weights["wl"] = jnp.pad(WL.astype(jnp.float32).T,
                            ((0, 0), (0, OUT_LANES - WL.shape[0]))).astype(jnp.bfloat16)
    weights["bl"] = jnp.pad(bL.astype(jnp.float32).reshape(1, -1),
                            ((0, 0), (0, OUT_LANES - bL.shape[0])))

    cfg = SoftQConfig(obs_dim=obs_dim, act_dim=act_dim, n_hidden=n_hidden,
                      fused=fused, in_pad=in_pad, obs_pad=obs_pad, act_pad=act_pad)
    return weights, cfg


@functools.partial(jax.jit, static_argnames=("config", "tile_b"))
def _soft_q_forward_jit(x, a, weights, *, config, tile_b):
    cfg = config
    B = x.shape[0]
    B_pad = _round_up(max(B, tile_b), tile_b)
    nb = B_pad // tile_b

    def resident(shape):  # weight/bias: same block every step -> stays in VMEM
        nd = len(shape)
        return pl.BlockSpec(shape, lambda i: (0,) * nd)

    if cfg.fused:
        # Single fused concat + cast + pad pass (one XLA fusion under this jit).
        xa = jnp.concatenate([x, a], axis=1).astype(jnp.bfloat16)
        xa = jnp.pad(xa, ((0, B_pad - B), (0, cfg.in_pad - (cfg.obs_dim + cfg.act_dim))))
        in_specs = [pl.BlockSpec((tile_b, cfg.in_pad), lambda i: (i, 0)),
                    resident((cfg.in_pad, HID)),
                    resident((1, HID))]
        args = [xa, weights["w0"], weights["b0"]]
    else:
        x_p = jnp.pad(x.astype(jnp.bfloat16),
                      ((0, B_pad - B), (0, cfg.obs_pad - cfg.obs_dim)))
        a_p = jnp.pad(a.astype(jnp.bfloat16),
                      ((0, B_pad - B), (0, cfg.act_pad - cfg.act_dim)))
        in_specs = [pl.BlockSpec((tile_b, cfg.obs_pad), lambda i: (i, 0)),
                    pl.BlockSpec((tile_b, cfg.act_pad), lambda i: (i, 0)),
                    resident((cfg.obs_pad, HID)),
                    resident((cfg.act_pad, HID)),
                    resident((1, HID))]
        args = [x_p, a_p, weights["w0x"], weights["w0a"], weights["b0"]]

    if cfg.n_hidden > 0:
        in_specs += [resident((cfg.n_hidden, HID, HID)),
                     resident((cfg.n_hidden, 1, HID))]
        args += [weights["wh"], weights["bh"]]
    in_specs += [resident((HID, OUT_LANES)), resident((1, OUT_LANES))]
    args += [weights["wl"], weights["bl"]]

    out_pad = pl.pallas_call(
        functools.partial(_soft_q_kernel, n_hidden=cfg.n_hidden, fused=cfg.fused),
        out_shape=jax.ShapeDtypeStruct((B_pad, OUT_Q), jnp.float32),
        grid=(nb,),
        in_specs=in_specs,
        out_specs=pl.BlockSpec((tile_b, OUT_Q), lambda i: (i, 0)),
        compiler_params=pltpu.CompilerParams(
            dimension_semantics=("parallel",),
            vmem_limit_bytes=48 * 1024 * 1024,
        ),
    )(*args)

    return out_pad[:B, :1]  # (B, 1) f32, matching the PyTorch module


def soft_q_forward(x, a, packed, *, tile_b=None):
    """x: (B, obs_dim), a: (B, act_dim); returns (B, 1) f32."""
    weights, cfg = packed
    tb = tile_b if tile_b is not None else _choose_tile_b(x.shape[0])
    return _soft_q_forward_jit(x, a, weights, config=cfg, tile_b=tb)


# ---------------------------------------------------------------------------
# Deterministic parameter construction (PyTorch nn.Linear-style uniform init)
# and pure-JAX f32 reference.
# ---------------------------------------------------------------------------
def make_params(key, obs_dim, act_dim, n_layers):
    input_dim = obs_dim + act_dim
    in_dims = [input_dim] + [256] * n_layers
    out_dims = [256] * n_layers + [1]
    params = []
    for in_d, out_d in zip(in_dims, out_dims):
        key, kw, kb = jax.random.split(key, 3)
        bound = 1.0 / jnp.sqrt(in_d)
        W = jax.random.uniform(kw, (out_d, in_d), jnp.float32, -bound, bound)
        b = jax.random.uniform(kb, (out_d,), jnp.float32, -bound, bound)
        params.append((W, b))
    return params


def ref_forward(x, a, params):
    h = jnp.concatenate([x.astype(jnp.float32), a.astype(jnp.float32)], axis=1)
    for W, b in params[:-1]:
        h = jnp.maximum(h @ W.T + b, 0.0)
    W, b = params[-1]
    return h @ W.T + b


if __name__ == "__main__":
    key = jax.random.PRNGKey(0)

    # --- Test 1: fused-concat path (obs_dim + act_dim <= 128), 2 hidden layers.
    k1, k2, k3, key = jax.random.split(key, 4)
    batch, obs_dim, act_dim, n_layers = 4, 17, 6, 2
    x = jax.random.normal(k1, (batch, obs_dim), jnp.float32)
    a = jax.random.normal(k2, (batch, act_dim), jnp.float32)
    params = make_params(k3, obs_dim, act_dim, n_layers)
    packed = pack_soft_q_params(params, obs_dim, act_dim)  # pack once, reuse
    out = jax.block_until_ready(soft_q_forward(x, a, packed))
    ref = ref_forward(x, a, params)
    assert out.shape == (batch, 1)
    # bf16 matmul inputs with f32 accumulation -> loosened tolerance vs f32 ref
    assert jnp.allclose(out, ref, atol=3e-2, rtol=3e-2)

    # --- Test 2: split-concat fallback (obs_dim + act_dim > 128), no extra hidden.
    k1, k2, k3, key = jax.random.split(key, 4)
    batch, obs_dim, act_dim, n_layers = 6, 150, 20, 1
    x = jax.random.normal(k1, (batch, obs_dim), jnp.float32)
    a = jax.random.normal(k2, (batch, act_dim), jnp.float32)
    params = make_params(k3, obs_dim, act_dim, n_layers)
    packed = pack_soft_q_params(params, obs_dim, act_dim)
    out = jax.block_until_ready(soft_q_forward(x, a, packed))
    ref = ref_forward(x, a, params)
    assert out.shape == (batch, 1)
    assert jnp.allclose(out, ref, atol=3e-2, rtol=3e-2)

    print("KERNEL_OK")
</pallas_src>

<mosaic_0001>
module attributes {stable_mosaic.version = 11 : i64} {
  func.func @_soft_q_kernel(%arg0: i32, %arg1: memref<8x128xbf16, #tpu.memory_space<vmem>>, %arg2: memref<128x256xbf16, #tpu.memory_space<vmem>>, %arg3: memref<1x256xf32, #tpu.memory_space<vmem>>, %arg4: memref<1x256x256xbf16, #tpu.memory_space<vmem>>, %arg5: memref<1x1x256xf32, #tpu.memory_space<vmem>>, %arg6: memref<256x128xbf16, #tpu.memory_space<vmem>>, %arg7: memref<1x128xf32, #tpu.memory_space<vmem>>, %arg8: memref<8x8xf32, #tpu.memory_space<vmem>>) attributes {dimension_semantics = [#tpu.dimension_semantics<parallel>], iteration_bounds = array<i64: 1>, scalar_prefetch = 0 : i64, scratch_operands = 0 : i64, tpu.core_type = #tpu.core_type<tc>, window_params = [{transform_indices = @transform_0, window_bounds = array<i64: 8, 128>}, {pipeline_mode = #tpu.pipeline_mode<synchronous>, transform_indices = @transform_1, window_bounds = array<i64: 128, 256>}, {pipeline_mode = #tpu.pipeline_mode<synchronous>, transform_indices = @transform_2, window_bounds = array<i64: 1, 256>}, {pipeline_mode = #tpu.pipeline_mode<synchronous>, transform_indices = @transform_3, window_bounds = array<i64: 1, 256, 256>}, {pipeline_mode = #tpu.pipeline_mode<synchronous>, transform_indices = @transform_4, window_bounds = array<i64: 1, 1, 256>}, {pipeline_mode = #tpu.pipeline_mode<synchronous>, transform_indices = @transform_5, window_bounds = array<i64: 256, 128>}, {pipeline_mode = #tpu.pipeline_mode<synchronous>, transform_indices = @transform_6, window_bounds = array<i64: 1, 128>}, {transform_indices = @transform_7, window_bounds = array<i64: 8, 8>}]} {
    %c0 = arith.constant 0 : index
    %c0_0 = arith.constant 0 : index
    %0 = vector.load %arg1[%c0, %c0_0] : memref<8x128xbf16, #tpu.memory_space<vmem>>, vector<8x128xbf16>
    %c0_1 = arith.constant 0 : index
    %c0_2 = arith.constant 0 : index
    %1 = vector.load %arg2[%c0_1, %c0_2] : memref<128x256xbf16, #tpu.memory_space<vmem>>, vector<128x256xbf16>
    %cst = arith.constant dense<0.000000e+00> : vector<8x256xf32>
    %2 = tpu.matmul %0, %1, %cst {dimension_numbers = #tpu.dot_dimension_numbers<[1], [0], [0], [1], [0, 0, 1, 1], [], []>} : vector<8x128xbf16>, vector<128x256xbf16>, vector<8x256xf32> -> vector<8x256xf32>
    %c0_3 = arith.constant 0 : index
    %c0_4 = arith.constant 0 : index
    %3 = vector.load %arg3[%c0_3, %c0_4] : memref<1x256xf32, #tpu.memory_space<vmem>>, vector<1x256xf32>
    %4 = vector.broadcast %3 : vector<1x256xf32> to vector<8x256xf32>
    %5 = arith.addf %2, %4 : vector<8x256xf32>
    %cst_5 = arith.constant 0.000000e+00 : f32
    %6 = vector.broadcast %cst_5 : f32 to vector<8x256xf32>
    %7 = arith.maximumf %5, %6 : vector<8x256xf32>
    %8 = arith.truncf %7 : vector<8x256xf32> to vector<8x256xbf16>
    %c0_6 = arith.constant 0 : index
    %c0_7 = arith.constant 0 : index
    %c0_8 = arith.constant 0 : index
    %9 = vector.load %arg4[%c0_6, %c0_7, %c0_8] : memref<1x256x256xbf16, #tpu.memory_space<vmem>>, vector<1x256x256xbf16>
    %10 = vector.shape_cast %9 : vector<1x256x256xbf16> to vector<256x256xbf16>
    %cst_9 = arith.constant dense<0.000000e+00> : vector<8x256xf32>
    %11 = tpu.matmul %8, %10, %cst_9 {dimension_numbers = #tpu.dot_dimension_numbers<[1], [0], [0], [1], [0, 0, 1, 1], [], []>} : vector<8x256xbf16>, vector<256x256xbf16>, vector<8x256xf32> -> vector<8x256xf32>
    %c0_10 = arith.constant 0 : index
    %c0_11 = arith.constant 0 : index
    %c0_12 = arith.constant 0 : index
    %12 = vector.load %arg5[%c0_10, %c0_11, %c0_12] : memref<1x1x256xf32, #tpu.memory_space<vmem>>, vector<1x1x256xf32>
    %13 = vector.shape_cast %12 : vector<1x1x256xf32> to vector<1x256xf32>
    %14 = vector.broadcast %13 : vector<1x256xf32> to vector<8x256xf32>
    %15 = arith.addf %11, %14 : vector<8x256xf32>
    %cst_13 = arith.constant 0.000000e+00 : f32
    %16 = vector.broadcast %cst_13 : f32 to vector<8x256xf32>
    %17 = arith.maximumf %15, %16 : vector<8x256xf32>
    %18 = arith.truncf %17 : vector<8x256xf32> to vector<8x256xbf16>
    %c0_14 = arith.constant 0 : index
    %c0_15 = arith.constant 0 : index
    %19 = vector.load %arg6[%c0_14, %c0_15] : memref<256x128xbf16, #tpu.memory_space<vmem>>, vector<256x128xbf16>
    %cst_16 = arith.constant dense<0.000000e+00> : vector<8x128xf32>
    %20 = tpu.matmul %18, %19, %cst_16 {dimension_numbers = #tpu.dot_dimension_numbers<[1], [0], [0], [1], [0, 0, 1, 1], [], []>} : vector<8x256xbf16>, vector<256x128xbf16>, vector<8x128xf32> -> vector<8x128xf32>
    %c0_17 = arith.constant 0 : index
    %c0_18 = arith.constant 0 : index
    %21 = vector.load %arg7[%c0_17, %c0_18] : memref<1x128xf32, #tpu.memory_space<vmem>>, vector<1x128xf32>
    %22 = vector.broadcast %21 : vector<1x128xf32> to vector<8x128xf32>
    %23 = arith.addf %20, %22 : vector<8x128xf32>
    %24 = vector.extract_strided_slice %23 {offsets = [0, 0], sizes = [8, 8], strides = [1, 1]} : vector<8x128xf32> to vector<8x8xf32>
    %c0_19 = arith.constant 0 : index
    %c0_20 = arith.constant 0 : index
    %25 = vector.load %arg8[%c0_19, %c0_20] : memref<8x8xf32, #tpu.memory_space<vmem>>, vector<8x8xf32>
    tpu.vector_store %arg8[%c0_19, %c0_20], %24 {strides = array<i32>} : memref<8x8xf32, #tpu.memory_space<vmem>>, vector<8x8xf32>,
    return
  }
  func.func @transform_0(%arg0: i32) -> (i32, i32) {
    %c0_i32 = arith.constant 0 : i32
    %c0_i32_0 = arith.constant 0 : i32
    return %arg0, %c0_i32 : i32, i32
  }
  func.func @transform_1(%arg0: i32) -> (i32, i32) {
    %c0_i32 = arith.constant 0 : i32
    %c0_i32_0 = arith.constant 0 : i32
    %c0_i32_1 = arith.constant 0 : i32
    return %c0_i32, %c0_i32_0 : i32, i32
  }
  func.func @transform_2(%arg0: i32) -> (i32, i32) {
    %c0_i32 = arith.constant 0 : i32
    %c0_i32_0 = arith.constant 0 : i32
    %c0_i32_1 = arith.constant 0 : i32
    return %c0_i32, %c0_i32_0 : i32, i32
  }
  func.func @transform_3(%arg0: i32) -> (i32, i32, i32) {
    %c0_i32 = arith.constant 0 : i32
    %c0_i32_0 = arith.constant 0 : i32
    %c0_i32_1 = arith.constant 0 : i32
    %c0_i32_2 = arith.constant 0 : i32
    return %c0_i32, %c0_i32_0, %c0_i32_1 : i32, i32, i32
  }
  func.func @transform_4(%arg0: i32) -> (i32, i32, i32) {
    %c0_i32 = arith.constant 0 : i32
    %c0_i32_0 = arith.constant 0 : i32
    %c0_i32_1 = arith.constant 0 : i32
    %c0_i32_2 = arith.constant 0 : i32
    return %c0_i32, %c0_i32_0, %c0_i32_1 : i32, i32, i32
  }
  func.func @transform_5(%arg0: i32) -> (i32, i32) {
    %c0_i32 = arith.constant 0 : i32
    %c0_i32_0 = arith.constant 0 : i32
    %c0_i32_1 = arith.constant 0 : i32
    return %c0_i32, %c0_i32_0 : i32, i32
  }
  func.func @transform_6(%arg0: i32) -> (i32, i32) {
    %c0_i32 = arith.constant 0 : i32
    %c0_i32_0 = arith.constant 0 : i32
    %c0_i32_1 = arith.constant 0 : i32
    return %c0_i32, %c0_i32_0 : i32, i32
  }
  func.func @transform_7(%arg0: i32) -> (i32, i32) {
    %c0_i32 = arith.constant 0 : i32
    %c0_i32_0 = arith.constant 0 : i32
    return %arg0, %c0_i32 : i32, i32
  }
}

</mosaic_0001>

<llo_original>
// kernel: _soft_q_forward_jit.1
$region0: #{_soft_q_forward_jit.1}
  #allocation0 [shape = 'u32[]', space=smem, size = 0x4, offset = 0x4, fixed_abs, tag = 'smem constant byte address 0x4 - core index']
  #allocation1 [shape = 'u32[144,128]{1,0:T(1,128)}', space=vmem, size = 0x12000, scoped, tag = 'internal scratch']
  %s0 = inlined_call_operand.vmem [shape: bf16[8,128], index: 0, kind: input, shape index: {}]
  %s1 = inlined_call_operand.hbm [shape: bf16[128,256], index: 1, kind: input, shape index: {}]
  %s2 = inlined_call_operand.vmem [shape: f32[1,256], index: 2, kind: input, shape index: {}]
  %s3 = inlined_call_operand.hbm [shape: bf16[1,256,256], index: 3, kind: input, shape index: {}]
  %s4 = inlined_call_operand.vmem [shape: f32[1,1,256], index: 4, kind: input, shape index: {}]
  %s5 = inlined_call_operand.hbm [shape: bf16[256,128], index: 5, kind: input, shape index: {}]
  %s6 = inlined_call_operand.vmem [shape: f32[1,128], index: 6, kind: input, shape index: {}]
  %s7 = inlined_call_operand.vmem [shape: f32[8,8], index: 7, kind: output, shape index: {}]
  %s8 = sld [smem:[#allocation0]]
  $region50: #{_soft_q_forward_jit.1} parent=0
    _
  %s10 = ssub.s32 1, %s8
  %s11 = scalar_select 0, %s10, %s8
  $region1: #{_soft_q_forward_jit.1} parent=0
    #allocation2 [shape = 'u8[65536]{0}', space=vmem, size = 0x10000, scoped, tag = 'input window, operand 1, single buffered']
    #allocation3 [shape = 's32[1]{0}', space=sflag, size = 0x4, scoped, tag = 'scoped memory for _soft_q_forward_jit.1']
    #allocation4 [shape = 'u8[131072]{0}', space=vmem, size = 0x20000, scoped, tag = 'input window, operand 3, single buffered']
    #allocation5 [shape = 's32[1]{0}', space=sflag, size = 0x4, scoped, tag = 'scoped memory for _soft_q_forward_jit.1']
    #allocation6 [shape = 'u8[65536]{0}', space=vmem, size = 0x10000, scoped, tag = 'input window, operand 5, single buffered']
    %12 = vsyncpa [#allocation3], 0
    %13 = vsyncpa [#allocation5], 0
    // Predicated region
    $region2: #{_soft_q_forward_jit.1} parent=1 // pred_check
      _
    $region3: #{_soft_q_forward_jit.1} parent=1 // pred_check_branch
      %15 = sbr.rel (0) target = $region5
    $region4: #{_soft_q_forward_jit.1} parent=1 // pred_region
      _
    $region5: #{_soft_q_forward_jit.1} parent=1 // pred_fallthru
      _
    // Predicated region
    $region6: #{_soft_q_forward_jit.1} parent=1 // pred_check
      _
    $region7: #{_soft_q_forward_jit.1} parent=1 // pred_check_branch
      %17 = sbr.rel (0) target = $region9
    $region8: #{_soft_q_forward_jit.1} parent=1 // pred_region
      %s19 = ssub.s32 2048, 2048
      %20 = vsyncadd [#allocation3], %s19
      %s21 = sshll.u32 [#allocation2], 4
      %s22 = int_to_ptr.vmem [resolvable:$true] %s21
      %27 = dma.hbm_to_vmem [thread:$0]  %s1, 2048, %s22, [#allocation3], 128, 128, 8
    $region9: #{_soft_q_forward_jit.1} parent=1 // pred_fallthru
      _
    // Predicated region
    $region10: #{_soft_q_forward_jit.1} parent=1 // pred_check
      _
    $region11: #{_soft_q_forward_jit.1} parent=1 // pred_check_branch
      %29 = sbr.rel (0) target = $region13
    $region12: #{_soft_q_forward_jit.1} parent=1 // pred_region
      _
    $region13: #{_soft_q_forward_jit.1} parent=1 // pred_fallthru
      _
    // Predicated region
    $region14: #{_soft_q_forward_jit.1} parent=1 // pred_check
      _
    $region15: #{_soft_q_forward_jit.1} parent=1 // pred_check_branch
      %31 = sbr.rel (0) target = $region17
    $region16: #{_soft_q_forward_jit.1} parent=1 // pred_region
      %s33 = ssub.s32 4096, 4096
      %34 = vsyncadd [#allocation5], %s33
      %s35 = sshll.u32 [#allocation4], 4
      %s36 = int_to_ptr.vmem [resolvable:$true] %s35
      %41 = dma.hbm_to_vmem [thread:$0]  %s3, 4096, %s36, [#allocation5], 128, 128, 8
    $region17: #{_soft_q_forward_jit.1} parent=1 // pred_fallthru
      _
    // Predicated region
    $region18: #{_soft_q_forward_jit.1} parent=1 // pred_check
      _
    $region19: #{_soft_q_forward_jit.1} parent=1 // pred_check_branch
      %43 = sbr.rel (0) target = $region21
    $region20: #{_soft_q_forward_jit.1} parent=1 // pred_region
      _
    $region21: #{_soft_q_forward_jit.1} parent=1 // pred_fallthru
      _
    // Predicated region
    $region22: #{_soft_q_forward_jit.1} parent=1 // pred_check
      _
    $region23: #{_soft_q_forward_jit.1} parent=1 // pred_check_branch
      %45 = sbr.rel (0) target = $region25
    $region24: #{_soft_q_forward_jit.1} parent=1 // pred_region
      %s47 = ssub.s32 2048, 2048
      %48 = vsyncadd [#allocation5], %s47
      %s49 = sshll.u32 [#allocation6], 4
      %s50 = int_to_ptr.vmem [resolvable:$true] %s49
      %55 = dma.hbm_to_vmem [thread:$0]  %s5, 2048, %s50, [#allocation5], 64, 64, 4
    $region25: #{_soft_q_forward_jit.1} parent=1 // pred_fallthru
      _
    // Predicated region
    $region26: #{_soft_q_forward_jit.1} parent=1 // pred_check
      _
    $region27: #{_soft_q_forward_jit.1} parent=1 // pred_check_branch
      %57 = sbr.rel (0) target = $region29
    $region28: #{_soft_q_forward_jit.1} parent=1 // pred_region
      _
    $region29: #{_soft_q_forward_jit.1} parent=1 // pred_fallthru
      _
    // Predicated region
    $region30: #{_soft_q_forward_jit.1} parent=1 // pred_check
      _
    $region31: #{_soft_q_forward_jit.1} parent=1 // pred_check_branch
      %59 = sbr.rel (0) target = $region33
    $region32: #{_soft_q_forward_jit.1} parent=1 // pred_region
      %60 = dma.done [#allocation3], 2048
    $region33: #{_soft_q_forward_jit.1} parent=1 // pred_fallthru
      _
    // Predicated region
    $region34: #{_soft_q_forward_jit.1} parent=1 // pred_check
      _
    $region35: #{_soft_q_forward_jit.1} parent=1 // pred_check_branch
      %62 = sbr.rel (0) target = $region37
    $region36: #{_soft_q_forward_jit.1} parent=1 // pred_region
      %63 = dma.done [#allocation5], 4096
    $region37: #{_soft_q_forward_jit.1} parent=1 // pred_fallthru
      _
    // Predicated region
    $region38: #{_soft_q_forward_jit.1} parent=1 // pred_check
      _
    $region39: #{_soft_q_forward_jit.1} parent=1 // pred_check_branch
      %65 = sbr.rel (0) target = $region41
    $region40: #{_soft_q_forward_jit.1} parent=1 // pred_region
      %66 = dma.done [#allocation5], 2048
    $region41: #{_soft_q_forward_jit.1} parent=1 // pred_fallthru
      _
    %v68 = vld [vmem:[%s0] sm:$0xf]
    %v69 = vld [vmem:[#allocation2] sm:$0xff]
    %v70 = vld [vmem:[#allocation2 + $0x8] sm:$0xff]
    %v71 = vld [vmem:[#allocation2 + $0x10] sm:$0xff]
    %v72 = vld [vmem:[#allocation2 + $0x18] sm:$0xff]
    %v73 = vld [vmem:[#allocation2 + $0x20] sm:$0xff]
    %v74 = vld [vmem:[#allocation2 + $0x28] sm:$0xff]
    %v75 = vld [vmem:[#allocation2 + $0x30] sm:$0xff]
    %v76 = vld [vmem:[#allocation2 + $0x38] sm:$0xff]
    %v77 = vld [vmem:[#allocation2 + $0x40] sm:$0xff]
    %v78 = vld [vmem:[#allocation2 + $0x48] sm:$0xff]
    %v79 = vld [vmem:[#allocation2 + $0x50] sm:$0xff]
    %v80 = vld [vmem:[#allocation2 + $0x58] sm:$0xff]
    %v81 = vld [vmem:[#allocation2 + $0x60] sm:$0xff]
    %v82 = vld [vmem:[#allocation2 + $0x68] sm:$0xff]
    %v83 = vld [vmem:[#allocation2 + $0x70] sm:$0xff]
    %v84 = vld [vmem:[#allocation2 + $0x78] sm:$0xff]
    %v85 = vld [vmem:[%s2] sm:$0x3]
    %v87 = vlaneseq
    %v88 = vshrl.u32 %v87, 7
    %v89 = vsub.s32 0, %v88
    %v90 = vrot.slane %v85, %v89
    %v91 = vlaneseq
    %v92 = vshrl.u32 %v91, 7
    %v93 = vsub.s32 1, %v92
    %v94 = vrot.slane %v85, %v93
    %v113 = vunpack.c.l.b16 %v69
    %v114 = vunpack.c.h.b16 %v69
    %v115 = vunpack.c.l.b16 %v70
    %v116 = vunpack.c.h.b16 %v70
    %v117 = vunpack.c.l.b16 %v71
    %v118 = vunpack.c.h.b16 %v71
    %v119 = vunpack.c.l.b16 %v72
    %v120 = vunpack.c.h.b16 %v72
    %v121 = vunpack.c.l.b16 %v73
    %v122 = vunpack.c.h.b16 %v73
    %v123 = vunpack.c.l.b16 %v74
    %v124 = vunpack.c.h.b16 %v74
    %v125 = vunpack.c.l.b16 %v75
    %v126 = vunpack.c.h.b16 %v75
    %v127 = vunpack.c.l.b16 %v76
    %v128 = vunpack.c.h.b16 %v76
    %v129 = vunpack.c.l.b16 %v77
    %v130 = vunpack.c.h.b16 %v77
    %v131 = vunpack.c.l.b16 %v78
    %v132 = vunpack.c.h.b16 %v78
    %v133 = vunpack.c.l.b16 %v79
    %v134 = vunpack.c.h.b16 %v79
    %v135 = vunpack.c.l.b16 %v80
    %v136 = vunpack.c.h.b16 %v80
    %v137 = vunpack.c.l.b16 %v81
    %v138 = vunpack.c.h.b16 %v81
    %v139 = vunpack.c.l.b16 %v82
    %v140 = vunpack.c.h.b16 %v82
    %v141 = vunpack.c.l.b16 %v83
    %v142 = vunpack.c.h.b16 %v83
    %v143 = vunpack.c.l.b16 %v84
    %v144 = vunpack.c.h.b16 %v84
    %v145 = vpack.c.b16 %v115, %v113
    %v146 = vpack.c.b16 %v116, %v114
    %v147 = vpack.c.b16 %v119, %v117
    %v148 = vpack.c.b16 %v120, %v118
    %v149 = vpack.c.b16 %v123, %v121
    %v150 = vpack.c.b16 %v124, %v122
    %v151 = vpack.c.b16 %v127, %v125
    %v152 = vpack.c.b16 %v128, %v126
    %v153 = vpack.c.b16 %v131, %v129
    %v154 = vpack.c.b16 %v132, %v130
    %v155 = vpack.c.b16 %v135, %v133
    %v156 = vpack.c.b16 %v136, %v134
    %v157 = vpack.c.b16 %v139, %v137
    %v158 = vpack.c.b16 %v140, %v138
    %v159 = vpack.c.b16 %v143, %v141
    %v160 = vpack.c.b16 %v144, %v142
    %177 = vmatprep.subr.bf16.mxu0 %v146
    %178 = vmatpush1.bf16.msra.mxu0 %v145
    %179 = vmatprep.subr.bf16.mxu0 %v148
    %180 = vmatpush1.bf16.msra.mxu0 %v147
    %181 = vmatprep.subr.bf16.mxu0 %v150
    %182 = vmatpush1.bf16.msra.mxu0 %v149
    %183 = vmatprep.subr.bf16.mxu0 %v152
    %184 = vmatpush1.bf16.msra.mxu0 %v151
    %185 = vmatprep.subr.bf16.mxu0 %v154
    %186 = vmatpush1.bf16.msra.mxu0 %v153
    %187 = vmatprep.subr.bf16.mxu0 %v156
    %188 = vmatpush1.bf16.msra.mxu0 %v155
    %189 = vmatprep.subr.bf16.mxu0 %v158
    %190 = vmatpush1.bf16.msra.mxu0 %v157
    %191 = vmatprep.subr.bf16.mxu0 %v160
    %192 = vmatpush1.bf16.msra.mxu0 %v159
    %193 = vmatprep.subr.bf16.mxu0 0
    %194 = vmatpush1.bf16.msra.mxu0 0
    %195 = vmatprep.subr.bf16.mxu0 0
    %196 = vmatpush1.bf16.msra.mxu0 0
    %197 = vmatprep.subr.bf16.mxu0 0
    %198 = vmatpush1.bf16.msra.mxu0 0
    %199 = vmatprep.subr.bf16.mxu0 0
    %200 = vmatpush1.bf16.msra.mxu0 0
    %201 = vmatprep.subr.bf16.mxu0 0
    %202 = vmatpush1.bf16.msra.mxu0 0
    %203 = vmatprep.subr.bf16.mxu0 0
    %204 = vmatpush1.bf16.msra.mxu0 0
    %205 = vmatprep.subr.bf16.mxu0 0
    %206 = vmatpush1.bf16.msra.mxu0 0
    %207 = vmatprep.subr.bf16.mxu0 0
    %208 = vmatpush1.bf16.msra.mxu0 0
    %209 = vmatprep.mubr.bf16.mxu0 0
    %210 = vmatmul.mubr.bf16.gmra.mrb[0].mxu0 %v68
    %v211 = vpop.f32.mrb[0].mxu0
    %v212 = vadd.f32 %v90, %v211
    %v213 = vpop.f32.mrb[0].mxu0
    %v214 = vadd.f32 %v94, %v213
    %v215 = vpop.f32.mrb[0].mxu0
    %v216 = vpop.f32.mrb[0].mxu0
    %217 = vdwg.mxu0
    %v218 = vmax.f32 %v212, 0.0
    %v219 = vmax.f32 %v214, 0.0
    %v220 = vpack.c.bf16 %v218, %v218
    %v221 = vpack.c.bf16 %v219, %v219
    %v222 = vld [vmem:[#allocation4] sm:$0xff]
    %v223 = vld [vmem:[#allocation4 + $0x8] sm:$0xff]
    %v224 = vld [vmem:[#allocation4 + $0x10] sm:$0xff]
    %v225 = vld [vmem:[#allocation4 + $0x18] sm:$0xff]
    %v226 = vld [vmem:[#allocation4 + $0x20] sm:$0xff]
    %v227 = vld [vmem:[#allocation4 + $0x28] sm:$0xff]
    %v228 = vld [vmem:[#allocation4 + $0x30] sm:$0xff]
    %v229 = vld [vmem:[#allocation4 + $0x38] sm:$0xff]
    %v230 = vld [vmem:[#allocation4 + $0x40] sm:$0xff]
    %v231 = vld [vmem:[#allocation4 + $0x48] sm:$0xff]
    %v232 = vld [vmem:[#allocation4 + $0x50] sm:$0xff]
    %v233 = vld [vmem:[#allocation4 + $0x58] sm:$0xff]
    %v234 = vld [vmem:[#allocation4 + $0x60] sm:$0xff]
    %v235 = vld [vmem:[#allocation4 + $0x68] sm:$0xff]
    %v236 = vld [vmem:[#allocation4 + $0x70] sm:$0xff]
    %v237 = vld [vmem:[#allocation4 + $0x78] sm:$0xff]
    %v238 = vld [vmem:[#allocation4 + $0x80] sm:$0xff]
    %v239 = vld [vmem:[#allocation4 + $0x88] sm:$0xff]
    %v240 = vld [vmem:[#allocation4 + $0x90] sm:$0xff]
    %v241 = vld [vmem:[#allocation4 + $0x98] sm:$0xff]
    %v242 = vld [vmem:[#allocation4 + $0xa0] sm:$0xff]
    %v243 = vld [vmem:[#allocation4 + $0xa8] sm:$0xff]
    %v244 = vld [vmem:[#allocation4 + $0xb0] sm:$0xff]
    %v245 = vld [vmem:[#allocation4 + $0xb8] sm:$0xff]
    %v246 = vld [vmem:[#allocation4 + $0xc0] sm:$0xff]
    %v247 = vld [vmem:[#allocation4 + $0xc8] sm:$0xff]
    %v248 = vld [vmem:[#allocation4 + $0xd0] sm:$0xff]
    %v249 = vld [vmem:[#allocation4 + $0xd8] sm:$0xff]
    %v250 = vld [vmem:[#allocation4 + $0xe0] sm:$0xff]
    %v251 = vld [vmem:[#allocation4 + $0xe8] sm:$0xff]
    %v252 = vld [vmem:[#allocation4 + $0xf0] sm:$0xff]
    %v253 = vld [vmem:[#allocation4 + $0xf8] sm:$0xff]
    %v254 = vld [vmem:[%s4] sm:$0x3]
    %v256 = vlaneseq
    %v257 = vshrl.u32 %v256, 7
    %v258 = vsub.s32 0, %v257
    %v259 = vrot.slane %v254, %v258
    %v260 = vlaneseq
    %v261 = vshrl.u32 %v260, 7
    %v262 = vsub.s32 1, %v261
    %v263 = vrot.slane %v254, %v262
    %v298 = vunpack.c.l.b16 %v222
    %v299 = vunpack.c.h.b16 %v222
    %v300 = vunpack.c.l.b16 %v223
    %v301 = vunpack.c.h.b16 %v223
    %v302 = vunpack.c.l.b16 %v224
    %v303 = vunpack.c.h.b16 %v224
    %v304 = vunpack.c.l.b16 %v225
    %v305 = vunpack.c.h.b16 %v225
    %v306 = vunpack.c.l.b16 %v226
    %v307 = vunpack.c.h.b16 %v226
    %v308 = vunpack.c.l.b16 %v227
    %v309 = vunpack.c.h.b16 %v227
    %v310 = vunpack.c.l.b16 %v228
    %v311 = vunpack.c.h.b16 %v228
    %v312 = vunpack.c.l.b16 %v229
    %v313 = vunpack.c.h.b16 %v229
    %v314 = vunpack.c.l.b16 %v230
    %v315 = vunpack.c.h.b16 %v230
    %v316 = vunpack.c.l.b16 %v231
    %v317 = vunpack.c.h.b16 %v231
    %v318 = vunpack.c.l.b16 %v232
    %v319 = vunpack.c.h.b16 %v232
    %v320 = vunpack.c.l.b16 %v233
    %v321 = vunpack.c.h.b16 %v233
    %v322 = vunpack.c.l.b16 %v234
    %v323 = vunpack.c.h.b16 %v234
    %v324 = vunpack.c.l.b16 %v235
    %v325 = vunpack.c.h.b16 %v235
    %v326 = vunpack.c.l.b16 %v236
    %v327 = vunpack.c.h.b16 %v236
    %v328 = vunpack.c.l.b16 %v237
    %v329 = vunpack.c.h.b16 %v237
    %v330 = vunpack.c.l.b16 %v238
    %v331 = vunpack.c.h.b16 %v238
    %v332 = vunpack.c.l.b16 %v239
    %v333 = vunpack.c.h.b16 %v239
    %v334 = vunpack.c.l.b16 %v240
    %v335 = vunpack.c.h.b16 %v240
    %v336 = vunpack.c.l.b16 %v241
    %v337 = vunpack.c.h.b16 %v241
    %v338 = vunpack.c.l.b16 %v242
    %v339 = vunpack.c.h.b16 %v242
    %v340 = vunpack.c.l.b16 %v243
    %v341 = vunpack.c.h.b16 %v243
    %v342 = vunpack.c.l.b16 %v244
    %v343 = vunpack.c.h.b16 %v244
    %v344 = vunpack.c.l.b16 %v245
    %v345 = vunpack.c.h.b16 %v245
    %v346 = vunpack.c.l.b16 %v246
    %v347 = vunpack.c.h.b16 %v246
    %v348 = vunpack.c.l.b16 %v247
    %v349 = vunpack.c.h.b16 %v247
    %v350 = vunpack.c.l.b16 %v248
    %v351 = vunpack.c.h.b16 %v248
    %v352 = vunpack.c.l.b16 %v249
    %v353 = vunpack.c.h.b16 %v249
    %v354 = vunpack.c.l.b16 %v250
    %v355 = vunpack.c.h.b16 %v250
    %v356 = vunpack.c.l.b16 %v251
    %v357 = vunpack.c.h.b16 %v251
    %v358 = vunpack.c.l.b16 %v252
    %v359 = vunpack.c.h.b16 %v252
    %v360 = vunpack.c.l.b16 %v253
    %v361 = vunpack.c.h.b16 %v253
    %v362 = vpack.c.b16 %v300, %v298
    %v363 = vpack.c.b16 %v301, %v299
    %v364 = vpack.c.b16 %v304, %v302
    %v365 = vpack.c.b16 %v305, %v303
    %v366 = vpack.c.b16 %v308, %v306
    %v367 = vpack.c.b16 %v309, %v307
    %v368 = vpack.c.b16 %v312, %v310
    %v369 = vpack.c.b16 %v313, %v311
    %v370 = vpack.c.b16 %v316, %v314
    %v371 = vpack.c.b16 %v317, %v315
    %v372 = vpack.c.b16 %v320, %v318
    %v373 = vpack.c.b16 %v321, %v319
    %v374 = vpack.c.b16 %v324, %v322
    %v375 = vpack.c.b16 %v325, %v323
    %v376 = vpack.c.b16 %v328, %v326
    %v377 = vpack.c.b16 %v329, %v327
    %v378 = vpack.c.b16 %v332, %v330
    %v379 = vpack.c.b16 %v333, %v331
    %v380 = vpack.c.b16 %v336, %v334
    %v381 = vpack.c.b16 %v337, %v335
    %v382 = vpack.c.b16 %v340, %v338
    %v383 = vpack.c.b16 %v341, %v339
    %v384 = vpack.c.b16 %v344, %v342
    %v385 = vpack.c.b16 %v345, %v343
    %v386 = vpack.c.b16 %v348, %v346
    %v387 = vpack.c.b16 %v349, %v347
    %v388 = vpack.c.b16 %v352, %v350
    %v389 = vpack.c.b16 %v353, %v351
    %v390 = vpack.c.b16 %v356, %v354
    %v391 = vpack.c.b16 %v357, %v355
    %v392 = vpack.c.b16 %v360, %v358
    %v393 = vpack.c.b16 %v361, %v359
    %426 = vmatprep.subr.bf16.mxu0 %v363
    %427 = vmatpush1.bf16.msra.mxu0 %v362
    %428 = vmatprep.subr.bf16.mxu0 %v365
    %429 = vmatpush1.bf16.msra.mxu0 %v364
    %430 = vmatprep.subr.bf16.mxu0 %v367
    %431 = vmatpush1.bf16.msra.mxu0 %v366
    %432 = vmatprep.subr.bf16.mxu0 %v369
    %433 = vmatpush1.bf16.msra.mxu0 %v368
    %434 = vmatprep.subr.bf16.mxu0 %v371
    %435 = vmatpush1.bf16.msra.mxu0 %v370
    %436 = vmatprep.subr.bf16.mxu0 %v373
    %437 = vmatpush1.bf16.msra.mxu0 %v372
    %438 = vmatprep.subr.bf16.mxu0 %v375
    %439 = vmatpush1.bf16.msra.mxu0 %v374
    %440 = vmatprep.subr.bf16.mxu0 %v377
    %441 = vmatpush1.bf16.msra.mxu0 %v376
    %442 = vmatprep.subr.bf16.mxu0 %v379
    %443 = vmatpush1.bf16.msra.mxu0 %v378
    %444 = vmatprep.subr.bf16.mxu0 %v381
    %445 = vmatpush1.bf16.msra.mxu0 %v380
    %446 = vmatprep.subr.bf16.mxu0 %v383
    %447 = vmatpush1.bf16.msra.mxu0 %v382
    %448 = vmatprep.subr.bf16.mxu0 %v385
    %449 = vmatpush1.bf16.msra.mxu0 %v384
    %450 = vmatprep.subr.bf16.mxu0 %v387
    %451 = vmatpush1.bf16.msra.mxu0 %v386
    %452 = vmatprep.subr.bf16.mxu0 %v389
    %453 = vmatpush1.bf16.msra.mxu0 %v388
    %454 = vmatprep.subr.bf16.mxu0 %v391
    %455 = vmatpush1.bf16.msra.mxu0 %v390
    %456 = vmatprep.subr.bf16.mxu0 %v393
    %457 = vmatpush1.bf16.msra.mxu0 %v392
    %458 = vmatprep.mubr.bf16.mxu0 %v221
    %459 = vmatmul.mubr.bf16.gmra.mrb[0].mxu0 %v220
    %v460 = vpop.f32.mrb[0].mxu0
    %v461 = vadd.f32 %v259, %v460
    %v462 = vpop.f32.mrb[0].mxu0
    %v463 = vadd.f32 %v263, %v462
    %v464 = vpop.f32.mrb[0].mxu0
    %v465 = vpop.f32.mrb[0].mxu0
    %466 = vdwg.mxu0
    %v467 = vmax.f32 %v461, 0.0
    %v468 = vmax.f32 %v463, 0.0
    %v469 = vpack.c.bf16 %v467, %v467
    %v470 = vpack.c.bf16 %v468, %v468
    %v471 = vld [vmem:[#allocation6] sm:$0xf]
    %v472 = vld [vmem:[#allocation6 + $0x4] sm:$0xf]
    %v473 = vld [vmem:[#allocation6 + $0x8] sm:$0xf]
    %v474 = vld [vmem:[#allocation6 + $0xc] sm:$0xf]
    %v475 = vld [vmem:[#allocation6 + $0x10] sm:$0xf]
    %v476 = vld [vmem:[#allocation6 + $0x14] sm:$0xf]
    %v477 = vld [vmem:[#allocation6 + $0x18] sm:$0xf]
    %v478 = vld [vmem:[#allocation6 + $0x1c] sm:$0xf]
    %v479 = vld [vmem:[#allocation6 + $0x20] sm:$0xf]
    %v480 = vld [vmem:[#allocation6 + $0x24] sm:$0xf]
    %v481 = vld [vmem:[#allocation6 + $0x28] sm:$0xf]
    %v482 = vld [vmem:[#allocation6 + $0x2c] sm:$0xf]
    %v483 = vld [vmem:[#allocation6 + $0x30] sm:$0xf]
    %v484 = vld [vmem:[#allocation6 + $0x34] sm:$0xf]
    %v485 = vld [vmem:[#allocation6 + $0x38] sm:$0xf]
    %v486 = vld [vmem:[#allocation6 + $0x3c] sm:$0xf]
    %v487 = vld [vmem:[#allocation6 + $0x40] sm:$0xf]
    %v488 = vld [vmem:[#allocation6 + $0x44] sm:$0xf]
    %v489 = vld [vmem:[#allocation6 + $0x48] sm:$0xf]
    %v490 = vld [vmem:[#allocation6 + $0x4c] sm:$0xf]
    %v491 = vld [vmem:[#allocation6 + $0x50] sm:$0xf]
    %v492 = vld [vmem:[#allocation6 + $0x54] sm:$0xf]
    %v493 = vld [vmem:[#allocation6 + $0x58] sm:$0xf]
    %v494 = vld [vmem:[#allocation6 + $0x5c] sm:$0xf]
    %v495 = vld [vmem:[#allocation6 + $0x60] sm:$0xf]
    %v496 = vld [vmem:[#allocation6 + $0x64] sm:$0xf]
    %v497 = vld [vmem:[#allocation6 + $0x68] sm:$0xf]
    %v498 = vld [vmem:[#allocation6 + $0x6c] sm:$0xf]
    %v499 = vld [vmem:[#allocation6 + $0x70] sm:$0xf]
    %v500 = vld [vmem:[#allocation6 + $0x74] sm:$0xf]
    %v501 = vld [vmem:[#allocation6 + $0x78] sm:$0xf]
    %v502 = vld [vmem:[#allocation6 + $0x7c] sm:$0xf]
    %v503 = vld [vmem:[%s6] sm:$0x1]
    %v505 = vlaneseq
    %v506 = vshrl.u32 %v505, 7
    %v507 = vsub.s32 0, %v506
    %v508 = vrot.slane %v503, %v507
    %v542 = vunpack.c.l.b16 %v471
    %v543 = vunpack.c.l.b16 %v472
    %v544 = vunpack.c.l.b16 %v473
    %v545 = vunpack.c.l.b16 %v474
    %v546 = vunpack.c.l.b16 %v475
    %v547 = vunpack.c.l.b16 %v476
    %v548 = vunpack.c.l.b16 %v477
    %v549 = vunpack.c.l.b16 %v478
    %v550 = vunpack.c.l.b16 %v479
    %v551 = vunpack.c.l.b16 %v480
    %v552 = vunpack.c.l.b16 %v481
    %v553 = vunpack.c.l.b16 %v482
    %v554 = vunpack.c.l.b16 %v483
    %v555 = vunpack.c.l.b16 %v484
    %v556 = vunpack.c.l.b16 %v485
    %v557 = vunpack.c.l.b16 %v486
    %v558 = vunpack.c.l.b16 %v487
    %v559 = vunpack.c.l.b16 %v488
    %v560 = vunpack.c.l.b16 %v489
    %v561 = vunpack.c.l.b16 %v490
    %v562 = vunpack.c.l.b16 %v491
    %v563 = vunpack.c.l.b16 %v492
    %v564 = vunpack.c.l.b16 %v493
    %v565 = vunpack.c.l.b16 %v494
    %v566 = vunpack.c.l.b16 %v495
    %v567 = vunpack.c.l.b16 %v496
    %v568 = vunpack.c.l.b16 %v497
    %v569 = vunpack.c.l.b16 %v498
    %v570 = vunpack.c.l.b16 %v499
    %v571 = vunpack.c.l.b16 %v500
    %v572 = vunpack.c.l.b16 %v501
    %v573 = vunpack.c.l.b16 %v502
    %v574 = vpack.c.b16 %v543, %v542
    %v575 = vpack.c.b16 %v545, %v544
    %v576 = vpack.c.b16 %v547, %v546
    %v577 = vpack.c.b16 %v549, %v548
    %v578 = vpack.c.b16 %v551, %v550
    %v579 = vpack.c.b16 %v553, %v552
    %v580 = vpack.c.b16 %v555, %v554
    %v581 = vpack.c.b16 %v557, %v556
    %v582 = vpack.c.b16 %v559, %v558
    %v583 = vpack.c.b16 %v561, %v560
    %v584 = vpack.c.b16 %v563, %v562
    %v585 = vpack.c.b16 %v565, %v564
    %v586 = vpack.c.b16 %v567, %v566
    %v587 = vpack.c.b16 %v569, %v568
    %v588 = vpack.c.b16 %v571, %v570
    %v589 = vpack.c.b16 %v573, %v572
    %606 = vmatprep.subr.bf16.mxu0 0
    %607 = vmatpush1.bf16.msra.mxu0 %v574
    %608 = vmatprep.subr.bf16.mxu0 0
    %609 = vmatpush1.bf16.msra.mxu0 %v575
    %610 = vmatprep.subr.bf16.mxu0 0
    %611 = vmatpush1.bf16.msra.mxu0 %v576
    %612 = vmatprep.subr.bf16.mxu0 0
    %613 = vmatpush1.bf16.msra.mxu0 %v577
    %614 = vmatprep.subr.bf16.mxu0 0
    %615 = vmatpush1.bf16.msra.mxu0 %v578
    %616 = vmatprep.subr.bf16.mxu0 0
    %617 = vmatpush1.bf16.msra.mxu0 %v579
    %618 = vmatprep.subr.bf16.mxu0 0
    %619 = vmatpush1.bf16.msra.mxu0 %v580
    %620 = vmatprep.subr.bf16.mxu0 0
    %621 = vmatpush1.bf16.msra.mxu0 %v581
    %622 = vmatprep.subr.bf16.mxu0 0
    %623 = vmatpush1.bf16.msra.mxu0 %v582
    %624 = vmatprep.subr.bf16.mxu0 0
    %625 = vmatpush1.bf16.msra.mxu0 %v583
    %626 = vmatprep.subr.bf16.mxu0 0
    %627 = vmatpush1.bf16.msra.mxu0 %v584
    %628 = vmatprep.subr.bf16.mxu0 0
    %629 = vmatpush1.bf16.msra.mxu0 %v585
    %630 = vmatprep.subr.bf16.mxu0 0
    %631 = vmatpush1.bf16.msra.mxu0 %v586
    %632 = vmatprep.subr.bf16.mxu0 0
    %633 = vmatpush1.bf16.msra.mxu0 %v587
    %634 = vmatprep.subr.bf16.mxu0 0
    %635 = vmatpush1.bf16.msra.mxu0 %v588
    %636 = vmatprep.subr.bf16.mxu0 0
    %637 = vmatpush1.bf16.msra.mxu0 %v589
    %638 = vmatprep.mubr.bf16.mxu0 %v470
    %639 = vmatmul.mubr.bf16.gmra.mrb[0].mxu0 %v469
    %v640 = vpop.f32.mrb[0].mxu0
    %v641 = vadd.f32 %v508, %v640
    %v642 = vpop.f32.mrb[0].mxu0
    %v643 = vpop.f32.mrb[0].mxu0
    %v644 = vpop.f32.mrb[0].mxu0
    %645 = vdwg.mxu0
    %vm646 = vcmask 64512
    %647 = vst.msk [vmem:[%s7] sm:$0xff] %vm646, %v641
    // Predicated region
    $region42: #{_soft_q_forward_jit.1} parent=1 // pred_check
      _
    $region43: #{_soft_q_forward_jit.1} parent=1 // pred_check_branch
      %649 = sbr.rel (0) target = $region45
    $region44: #{_soft_q_forward_jit.1} parent=1 // pred_region
      _
    $region45: #{_soft_q_forward_jit.1} parent=1 // pred_fallthru
      _
    // Predicated region
    $region46: #{_soft_q_forward_jit.1} parent=1 // pred_check
      _
    $region47: #{_soft_q_forward_jit.1} parent=1 // pred_check_branch
      %651 = sbr.rel (0) target = $region49
    $region48: #{_soft_q_forward_jit.1} parent=1 // pred_region
      _
    $region49: #{_soft_q_forward_jit.1} parent=1 // pred_fallthru
      _
    %652 = vsyncpa [#allocation3], 1
    %653 = vsyncpa [#allocation5], 1

</llo_original>
